<compile_context>
chip_gen: v7x
topology: tpu7x:2x2x1
jax: 0.10.0
libtpu: 0.0.40
codegen_flags: <defaults>
</compile_context>

<pallas_src>
import functools
import math

import numpy as np

import jax
import jax.numpy as jnp
from jax.experimental import pallas as pl
from jax.experimental.pallas import tpu as pltpu


_LANE = 128                      # TPU vreg lane width
_SUBLANE = 8                     # TPU vreg sublane count (f32)
_TILE_BYTES = 4 * 1024 * 1024    # per-tile target; x2 pipeline buffers = 8 MiB
_MAX_LANE_WIDTH = 2048           # cap on folded lane-dense row width
_VMEM_LIMIT = 32 * 1024 * 1024   # explicit scoped-VMEM limit (safe on v5e/v6e/v7x)


def _softplus_sum_kernel(x_ref, out_ref, *, tile_rows, n_rows,
                         flip_period, needs_row_mask):
    """One grid step: partial sum of softplus(x) (with column-0 flip) over this block."""
    x = x_ref[...].astype(jnp.float32)                 # [tile_rows, W], f32 compute
    # Numerically stable softplus: log(1+exp(x)) = max(x,0) + log(1+exp(-|x|)).
    sp = jnp.maximum(x, 0.0) + jnp.log(1.0 + jnp.exp(-jnp.abs(x)))
    if flip_period is not None:
        # softplus(-x) = softplus(x) - x, so flipping the sign of the marked
        # (original column-0) positions is just subtracting x there.  The
        # mask is built in-kernel from iota + a compile-time int, so nothing
        # is captured as a constant.
        col = jax.lax.broadcasted_iota(jnp.int32, x.shape, 1)
        flip = (col % flip_period) == 0
        sp = sp - jnp.where(flip, x, 0.0)
    if needs_row_mask:
        # Remainder block: rows past the end of the array are padding.
        row = (jax.lax.broadcasted_iota(jnp.int32, x.shape, 0)
               + pl.program_id(0) * tile_rows)
        sp = jnp.where(row < n_rows, sp, 0.0)
    out_ref[0, 0] = jnp.sum(sp)


def _choose_width(n, last, flip_period):
    """Largest lane-dense row width <= _MAX_LANE_WIDTH that divides n.

    Must be a multiple of flip_period (so the flip positions stay a pure
    per-lane pattern); multiples of 128 are preferred (lane-dense rows,
    long contiguous DMA)."""
    base = flip_period if flip_period is not None else 1
    best, best_key = None, None
    for w in range(base, _MAX_LANE_WIDTH + 1, base):
        if n % w:
            continue
        key = (w % _LANE == 0, w)       # prefer multiple-of-128, then wider
        if best_key is None or key > best_key:
            best_key, best = key, w
    if best is None:
        best = last                      # natural [B, C] view always divides n
    return best


def _softplus_sum(x, flip_period=None):
    """sum(softplus(v)) over all elements of 2-D `x`, additionally subtracting
    sum(v) over the elements whose flat (row-major) index is a multiple of
    `flip_period` (== the original column-0 elements when flip_period == x.shape[1])."""
    n = int(x.size)
    last = int(x.shape[-1])
    itemsize = x.dtype.itemsize

    # ---- lane-dense 2-D view (a free reshape of the contiguous array) ----
    width = _choose_width(n, last, flip_period)
    if flip_period is not None:
        assert width % flip_period == 0
    x2 = x.reshape(n // width, width)
    rows = n // width

    # ---- row tiling, sized against the *lane-padded* VMEM footprint ----
    # TODO(synk): extremely wide candidate rows (width*8*itemsize > tile budget)
    # would additionally need column tiling; not needed for realistic shapes.
    padded_width = ((width + _LANE - 1) // _LANE) * _LANE
    target_rows = max(1, _TILE_BYTES // (padded_width * itemsize))
    if target_rows >= rows:
        tile_rows = rows                  # single block along rows (always legal)
    else:
        tile_rows = max(_SUBLANE, (target_rows // _SUBLANE) * _SUBLANE)
    num_blocks = pl.cdiv(rows, tile_rows)
    needs_row_mask = (num_blocks * tile_rows != rows)

    kernel = functools.partial(
        _softplus_sum_kernel,
        tile_rows=tile_rows, n_rows=rows,
        flip_period=flip_period, needs_row_mask=needs_row_mask)

    partials = pl.pallas_call(
        kernel,
        out_shape=jax.ShapeDtypeStruct((num_blocks, 1), jnp.float32),
        grid_spec=pl.GridSpec(
            grid=(num_blocks,),
            in_specs=[pl.BlockSpec((tile_rows, width), lambda i: (i, 0))],
            out_specs=pl.BlockSpec((1, 1), lambda i: (i, 0),
                                   memory_space=pltpu.MemorySpace.SMEM),
        ),
        compiler_params=pltpu.CompilerParams(
            dimension_semantics=("parallel",),
            vmem_limit_bytes=_VMEM_LIMIT,
        ),
        cost_estimate=pl.CostEstimate(
            flops=int(6 * n),
            transcendentals=int(2 * n),
            bytes_accessed=int(n * itemsize + num_blocks * 4),
        ),
    )(x2)
    return jnp.sum(partials)


def logistic_loss(positive, negative_1):
    """Forward pass of the PyTorch `logistic_loss` module (Pallas TPU)."""
    assert positive.ndim == 2 and negative_1.ndim == 2
    assert positive.shape[0] == negative_1.shape[0]
    B, P = positive.shape
    _, N1 = negative_1.shape
    total = _softplus_sum(positive, flip_period=P) + _softplus_sum(negative_1)
    return total / float(B * (P + N1))


def _reference(positive, negative_1):
    """float64 numpy transcription of the PyTorch reference (ground truth)."""
    p = np.asarray(positive, dtype=np.float64)
    n1 = np.asarray(negative_1, dtype=np.float64)
    scores = np.concatenate([p, n1], axis=-1)
    truth = np.ones((1, scores.shape[1]), dtype=np.float64)
    truth[0, 0] = -1.0
    truth = -truth
    x = np.log1p(np.exp(-scores * truth))
    return x.sum() / (scores.shape[1] * p.shape[0])


if __name__ == "__main__":
    key = jax.random.PRNGKey(0)
    k1, k2, k3, k4 = jax.random.split(key, 4)

    # Small shapes consistent with the module: positive [B, P], negative_1 [B, N1].
    B, P, N1 = 8, 8, 16
    positive = jax.random.normal(k1, (B, P), dtype=jnp.float32)
    negative_1 = jax.random.normal(k2, (B, N1), dtype=jnp.float32)

    loss = jax.block_until_ready(logistic_loss(positive, negative_1))
    ref = _reference(positive, negative_1)
    assert jnp.allclose(loss, ref, atol=1e-6, rtol=5e-4), (loss, ref)

    # A larger case that exercises the multi-block grid, the masked remainder
    # block and the lane-dense folding (both flip and no-flip paths).
    B2, P2, N12 = 70000, 16, 20
    positive2 = jax.random.normal(k3, (B2, P2), dtype=jnp.float32)
    negative_12 = jax.random.normal(k4, (B2, N12), dtype=jnp.float32)
    loss2 = jax.block_until_ready(logistic_loss(positive2, negative_12))
    ref2 = _reference(positive2, negative_12)
    assert jnp.allclose(loss2, ref2, atol=1e-6, rtol=5e-4), (loss2, ref2)

    print("KERNEL_OK")
</pallas_src>

<mosaic_0001>
module attributes {stable_mosaic.version = 11 : i64} {
  func.func @_softplus_sum_kernel(%arg0: i32, %arg1: memref<1x64xf32, #tpu.memory_space<vmem>>, %arg2: memref<1x1xf32, #tpu.memory_space<smem>>) attributes {dimension_semantics = [#tpu.dimension_semantics<parallel>], iteration_bounds = array<i64: 1>, scalar_prefetch = 0 : i64, scratch_operands = 0 : i64, tpu.core_type = #tpu.core_type<tc>, window_params = [{transform_indices = @transform_0, window_bounds = array<i64: 1, 64>}, {transform_indices = @transform_1, window_bounds = array<i64: 1, 1>}]} {
    %c0 = arith.constant 0 : index
    %c0_0 = arith.constant 0 : index
    %0 = vector.load %arg1[%c0, %c0_0] : memref<1x64xf32, #tpu.memory_space<vmem>>, vector<1x64xf32>
    %cst = arith.constant 0.000000e+00 : f32
    %1 = vector.broadcast %cst : f32 to vector<1x64xf32>
    %2 = arith.maximumf %0, %1 : vector<1x64xf32>
    %3 = math.absf %0 : vector<1x64xf32>
    %cst_1 = arith.constant 0.000000e+00 : f32
    %4 = vector.broadcast %cst_1 : f32 to vector<1x64xf32>
    %5 = arith.subf %4, %3 : vector<1x64xf32>
    %6 = math.exp %5 : vector<1x64xf32>
    %cst_2 = arith.constant 1.000000e+00 : f32
    %7 = vector.broadcast %cst_2 : f32 to vector<1x64xf32>
    %8 = arith.addf %7, %6 : vector<1x64xf32>
    %9 = math.log %8 : vector<1x64xf32>
    %10 = arith.addf %2, %9 : vector<1x64xf32>
    %11 = tpu.iota {dimensions = array<i32: 1>} : vector<1x64xi32>
    %c8_i32 = arith.constant 8 : i32
    %c0_i32 = arith.constant 0 : i32
    %12 = arith.cmpi eq, %c8_i32, %c0_i32 : i32
    %c1_i32 = arith.constant 1 : i32
    %13 = arith.select %12, %c1_i32, %c8_i32 : i32
    %14 = vector.broadcast %13 : i32 to vector<1x64xi32>
    %15 = arith.remsi %11, %14 : vector<1x64xi32>
    %c0_i32_3 = arith.constant 0 : i32
    %16 = vector.broadcast %c0_i32_3 : i32 to vector<1x64xi32>
    %17 = arith.cmpi ne, %15, %16 : vector<1x64xi32>
    %c0_i32_4 = arith.constant 0 : i32
    %18 = vector.broadcast %c0_i32_4 : i32 to vector<1x64xi32>
    %19 = arith.cmpi slt, %15, %18 : vector<1x64xi32>
    %c0_i32_5 = arith.constant 0 : i32
    %20 = arith.cmpi slt, %13, %c0_i32_5 : i32
    %21 = vector.broadcast %20 : i1 to vector<1x64xi1>
    %22 = vector.broadcast %21 : vector<1x64xi1> to vector<1x64xi1>
    %23 = arith.xori %19, %22 : vector<1x64xi1>
    %24 = arith.andi %23, %17 : vector<1x64xi1>
    %25 = vector.broadcast %13 : i32 to vector<1x64xi32>
    %26 = arith.addi %15, %25 : vector<1x64xi32>
    %27 = arith.select %24, %26, %15 : vector<1x64xi1>, vector<1x64xi32>
    %c0_i32_6 = arith.constant 0 : i32
    %28 = vector.broadcast %c0_i32_6 : i32 to vector<1x64xi32>
    %29 = arith.cmpi eq, %27, %28 : vector<1x64xi32>
    %cst_7 = arith.constant 0.000000e+00 : f32
    %30 = vector.broadcast %cst_7 : f32 to vector<1x64xf32>
    %31 = arith.select %29, %0, %30 : vector<1x64xi1>, vector<1x64xf32>
    %32 = arith.subf %10, %31 : vector<1x64xf32>
    %33 = vector.shape_cast %32 : vector<1x64xf32> to vector<1x1x64xf32>
    %cst_8 = arith.constant dense<0.000000e+00> : vector<1xf32>
    %34 = vector.multi_reduction <add>, %33, %cst_8 [1, 2] : vector<1x1x64xf32> to vector<1xf32>
    %35 = vector.shape_cast %34 : vector<1xf32> to vector<1x1x1xf32>
    %36 = vector.extract %35[0, 0, 0] : f32 from vector<1x1x1xf32>
    %c0_9 = arith.constant 0 : index
    %c0_10 = arith.constant 0 : index
    %37 = memref.load %arg2[%c0_9, %c0_10] : memref<1x1xf32, #tpu.memory_space<smem>>
    memref.store %36, %arg2[%c0_9, %c0_10] : memref<1x1xf32, #tpu.memory_space<smem>>
    return
  }
  func.func @transform_0(%arg0: i32) -> (i32, i32) {
    %c0_i32 = arith.constant 0 : i32
    %c0_i32_0 = arith.constant 0 : i32
    return %arg0, %c0_i32 : i32, i32
  }
  func.func @transform_1(%arg0: i32) -> (i32, i32) {
    %c0_i32 = arith.constant 0 : i32
    %c0_i32_0 = arith.constant 0 : i32
    return %arg0, %c0_i32 : i32, i32
  }
}

</mosaic_0001>

<llo_original>
// kernel: tpu_custom_call.1
$region0: #{tpu_custom_call.1}
  #allocation0 [shape = 'u32[]', space=smem, size = 0x4, offset = 0x4, fixed_abs, tag = 'smem constant byte address 0x4 - core index']
  #allocation1 [shape = 'u32[144,128]{1,0:T(1,128)}', space=vmem, size = 0x12000, scoped, tag = 'internal scratch']
  %s0 = inlined_call_operand.hbm [shape: f32[1,64], index: 0, kind: input, shape index: {}]
  %s1 = inlined_call_operand.hbm [shape: f32[1,1], index: 1, kind: output, shape index: {}]
  %s2 = sld [smem:[#allocation0]]
  $region18: #{tpu_custom_call.1} parent=0
    _
  %s4 = ssub.s32 1, %s2
  %s5 = scalar_select 0, %s4, %s2
  $region1: #{tpu_custom_call.1} parent=0
    #allocation2 [shape = 'u8[512]{0}', space=vmem, size = 0x400, scoped, tag = 'input window, operand 0, single buffered']
    #allocation3 [shape = 's32[1]{0}', space=sflag, size = 0x4, scoped, tag = 'scoped memory for tpu_custom_call.1']
    #allocation4 [shape = 's32[1]{0}', space=sflag, size = 0x4, scoped, tag = 'scoped memory for tpu_custom_call.1']
    #allocation5 [shape = 'u8[512]{0}', space=smem, size = 0x200, scoped, tag = 'output window, operand 0, single buffered']
    %6 = vsyncpa [#allocation3], 0
    %7 = vsyncpa [#allocation4], 0
    // Predicated region
    $region2: #{tpu_custom_call.1} parent=1 // pred_check
      _
    $region3: #{tpu_custom_call.1} parent=1 // pred_check_branch
      %9 = sbr.rel (0) target = $region5
    $region4: #{tpu_custom_call.1} parent=1 // pred_region
      %s11 = ssub.s32 16, 16
      %12 = vsyncadd [#allocation3], %s11
      %s14 = sshll.u32 [#allocation2], 4
      %s15 = int_to_ptr.vmem [resolvable:$true] %s14
      %17 = dma.hbm_to_vmem [thread:$0]  %s0, 16, %s15, [#allocation3]
    $region5: #{tpu_custom_call.1} parent=1 // pred_fallthru
      _
    // Predicated region
    $region6: #{tpu_custom_call.1} parent=1 // pred_check
      _
    $region7: #{tpu_custom_call.1} parent=1 // pred_check_branch
      %19 = sbr.rel (0) target = $region9
    $region8: #{tpu_custom_call.1} parent=1 // pred_region
      %20 = dma.done [#allocation3], 16
    $region9: #{tpu_custom_call.1} parent=1 // pred_fallthru
      _
    %v21 = vld [vmem:[#allocation2] sm:$0x1]
    %v22 = vmax.f32 %v21, 0.0
    %v23 = vand.u32 2147483647, %v21
    %v24 = vsub.f32 0.0, %v23
    %v25 = vmul.f32 %v24, 1.442695
    %v26 = vpow.pop %v25
    %v27 = vadd.f32 %v26, 1.0
    %v28 = vlog2.pop %v27
    %v29 = vmul.f32 %v28, 0.6931472
    %v30 = vadd.f32 %v22, %v29
    %v31 = vlaneseq
    %v32 = vand.u32 %v31, 127
    %vm33 = vcmp.lt.s32.totalorder %v32, 0
    %v34 = vsub.s32 0, %v32
    %v35 = vsel %vm33, %v34, %v32
    %v36 = vshrl.u32 %v35, 3
    %v37 = vand.u32 %v35, 7
    %v38 = vsub.s32 0, %v37
    %v39 = vsel %vm33, %v38, %v37
    %vm40 = vcmp.ne.s32.totalorder %v39, 0
    %vm41 = vcmp.lt.s32.totalorder %v39, 0
    %vm42 = vmand %vm41, %vm40
    %v43 = vadd.s32 %v39, 8
    %v44 = vsel %vm42, %v43, %v39
    %vm45 = vcmp.eq.s32.totalorder %v44, 0
    %v46 = vsel %vm45, %v21, 0.0
    %v47 = vsub.f32 %v30, %v46
    %vm48 = vcmask 516096
    %v49 = vsel %vm48, %v47, 0.0
    %50 = vadd.xlane.f32.xlu0 %v49
    %v51 = vpop.xlane.xlu0 %50
    %v52 = vrot.slane %v51, 4
    %v53 = vadd.f32 %v51, %v52
    %v54 = vrot.slane %v53, 2
    %v55 = vadd.f32 %v53, %v54
    %v56 = vrot.slane %v55, 1
    %v57 = vadd.f32 %v55, %v56
    %s58 = vtos %v57
    %s59 = scalar_lea.smem [#allocation5], 0
    %60 = sst [smem:[%s59]] %s58
    // Predicated region
    $region10: #{tpu_custom_call.1} parent=1 // pred_check
      _
    $region11: #{tpu_custom_call.1} parent=1 // pred_check_branch
      %62 = sbr.rel (0) target = $region13
    $region12: #{tpu_custom_call.1} parent=1 // pred_region
      %s64 = ssub.s32 16, 16
      %65 = vsyncadd [#allocation4], %s64
      %68 = dma.smem_to_hbm [#allocation5], 16, %s1, [#allocation4]
    $region13: #{tpu_custom_call.1} parent=1 // pred_fallthru
      _
    // Predicated region
    $region14: #{tpu_custom_call.1} parent=1 // pred_check
      _
    $region15: #{tpu_custom_call.1} parent=1 // pred_check_branch
      %70 = sbr.rel (0) target = $region17
    $region16: #{tpu_custom_call.1} parent=1 // pred_region
      %71 = dma.done [#allocation4], 16
    $region17: #{tpu_custom_call.1} parent=1 // pred_fallthru
      _
    %72 = sfence
    %73 = vsyncpa [#allocation3], 1
    %74 = vsyncpa [#allocation4], 1

</llo_original>
